<compile_context>
chip_gen: v7x
topology: tpu7x:2x2x1
jax: 0.10.0
libtpu: 0.0.40
codegen_flags: <defaults>
</compile_context>

<pallas_src>
import math

import jax
import jax.numpy as jnp
from jax.experimental import pallas as pl
from jax.experimental.pallas import tpu as pltpu


def _stochastic_depth_kernel(x_ref, s_ref, o_ref):
    # x_ref/o_ref: (tR, C) lane-dense row tile; s_ref: (tR, 1) per-row scale in
    # x.dtype (1/keep_rate for kept samples, 0 for dropped).  Pure streaming
    # multiply in the native dtype; mem-bound.
    o_ref[...] = (x_ref[...] * s_ref[...]).astype(o_ref.dtype)


def _lane_dense_cols(F: int, max_lanes: int = 4096) -> int:
    """Largest multiple of 128 that divides F (capped at max_lanes); 0 if none."""
    c = min(max_lanes, (F // 128) * 128)
    while c >= 128:
        if F % c == 0:
            return c
        c -= 128
    return 0


def _pick_row_tile(rows: int, C: int, itemsize: int,
                   target_block_bytes: int, sub: int) -> int:
    """Row tile ~target_block_bytes, multiple of `sub`, preferring an exact
    divisor of `rows` so every store is unmasked and every DMA full-sized."""
    if rows <= sub:
        return rows
    t = max(sub, min(rows, target_block_bytes // (C * itemsize)))
    t = max(sub, (t // sub) * sub)
    t = min(t, rows)
    # Prefer an exact divisor near the target (search down to ~half the target).
    lower = max(sub, t // 2)
    cand = t
    while cand >= lower:
        if rows % cand == 0:
            return cand
        cand -= sub
    return t


def stochastic_depth(x: jax.Array,
                     drop_rate: float,
                     key: jax.Array,
                     train: bool = True,
                     target_block_bytes: int = 4 * 1024 * 1024) -> jax.Array:
    """Pallas implementation of StochasticDepth.forward."""
    assert 0.0 <= drop_rate <= 1.0, "drop_rate must be in [0, 1]"
    if (not train) or drop_rate == 0.0:
        return x
    keep_rate = 1.0 - float(drop_rate)
    if keep_rate <= 0.0:
        # drop_rate == 1.0: every sample is dropped (avoids 1/0 below).
        return jnp.zeros_like(x)

    B = x.shape[0]
    F = math.prod(x.shape[1:])
    itemsize = jnp.dtype(x.dtype).itemsize

    # Per-sample Bernoulli(keep_rate) in f32 (keep probability not quantized),
    # then the resulting scale is cast once to x.dtype for a native multiply.
    u = jax.random.uniform(key, (B,), dtype=jnp.float32)
    scale = jnp.where(u < keep_rate,
                      jnp.float32(1.0 / keep_rate),
                      jnp.float32(0.0)).astype(x.dtype)

    # Lane-dense (rows, C) view of x.  If F has no multiple-of-128 factor,
    # pad F up to a lane multiple (pad -> kernel -> slice) instead of using a
    # whole-tensor block.
    C = _lane_dense_cols(F)
    xf = x.reshape(B, F)
    if C == 0:
        C = 512 if F >= 512 else 128
        Fw = ((F + C - 1) // C) * C
        xf = jnp.pad(xf, ((0, 0), (0, Fw - F)))
    else:
        Fw = F
    R = Fw // C
    rows = B * R
    xv = xf.reshape(rows, C)
    # Row r of xv belongs to batch element r // R -> repeat the scale R times.
    scale_rows = jnp.repeat(scale, R).reshape(rows, 1)

    # Sublane-packing-friendly row tile (8 f32 / 16 bf16 / 32 int8).
    sub = max(8, 32 // max(1, itemsize))
    tR = _pick_row_tile(rows, C, itemsize, target_block_bytes, sub)
    n_blocks = pl.cdiv(rows, tR)

    grid_spec = pl.GridSpec(
        grid=(n_blocks,),
        in_specs=[pl.BlockSpec((tR, C), lambda i: (i, 0)),
                  pl.BlockSpec((tR, 1), lambda i: (i, 0))],
        out_specs=pl.BlockSpec((tR, C), lambda i: (i, 0)),
    )

    out = pl.pallas_call(
        _stochastic_depth_kernel,
        out_shape=jax.ShapeDtypeStruct((rows, C), x.dtype),
        grid_spec=grid_spec,
        compiler_params=pltpu.CompilerParams(
            dimension_semantics=("parallel",),
            # 2x(in) + 2x(out) 4 MiB buffers = 16 MiB + tiny scale buffers:
            # headroom under v7x's 64 MiB physical VMEM, well under v5e/v6e.
            vmem_limit_bytes=48 * 1024 * 1024),
        cost_estimate=pl.CostEstimate(
            flops=rows * C,
            transcendentals=0,
            bytes_accessed=2 * rows * C * itemsize + rows * itemsize),
    )(xv, scale_rows)

    if Fw != F:
        out = out.reshape(B, Fw)[:, :F]
    return out.reshape(x.shape)


def _reference(x, drop_rate, key):
    keep_rate = 1.0 - drop_rate
    u = jax.random.uniform(key, (x.shape[0],), dtype=jnp.float32)
    scale = jnp.where(u < keep_rate, 1.0 / keep_rate, 0.0).astype(x.dtype)
    return x * scale.reshape((x.shape[0],) + (1,) * (x.ndim - 1))


if __name__ == "__main__":
    key = jax.random.PRNGKey(0)
    k_x, k_mask, k_x2, k_x3 = jax.random.split(key, 4)

    # ViT-ish small shape: batch=2, seq=8, hidden=32.
    B, N, D = 2, 8, 32
    x = jax.random.normal(k_x, (B, N, D), dtype=jnp.float32)
    drop_rate = 0.5

    # Train path (stochastic per-sample drop) vs. reference with identical draws.
    out = jax.block_until_ready(stochastic_depth(x, drop_rate, k_mask, train=True))
    ref = _reference(x, drop_rate, k_mask)
    assert jnp.allclose(out, ref, atol=1e-6), "mismatch vs reference (f32)"

    # Eval path: identity.
    out_eval = jax.block_until_ready(
        stochastic_depth(x, drop_rate, k_mask, train=False))
    assert jnp.allclose(out_eval, x), "eval path must be identity"

    # Edge cases: drop_rate == 0 -> identity; drop_rate == 1 -> zeros (no 1/0).
    out_p0 = jax.block_until_ready(stochastic_depth(x, 0.0, k_mask, train=True))
    assert jnp.allclose(out_p0, x), "drop_rate=0 must be identity"
    out_p1 = jax.block_until_ready(stochastic_depth(x, 1.0, k_mask, train=True))
    assert jnp.allclose(out_p1, jnp.zeros_like(x)), "drop_rate=1 must be zeros"

    # Pad-fallback path: per-sample size with no multiple-of-128 factor (F=105).
    x_odd = jax.random.normal(k_x2, (2, 3, 5, 7), dtype=jnp.float32)
    out_odd = jax.block_until_ready(
        stochastic_depth(x_odd, drop_rate, k_mask, train=True))
    ref_odd = _reference(x_odd, drop_rate, k_mask)
    assert jnp.allclose(out_odd, ref_odd, atol=1e-6), "mismatch on padded path"

    # bf16 input: native-dtype multiply path.
    x_bf = jax.random.normal(k_x3, (B, N, D), dtype=jnp.bfloat16)
    out_bf = jax.block_until_ready(
        stochastic_depth(x_bf, drop_rate, k_mask, train=True))
    ref_bf = _reference(x_bf, drop_rate, k_mask)
    assert jnp.allclose(out_bf.astype(jnp.float32), ref_bf.astype(jnp.float32),
                        atol=1e-2, rtol=1e-2), "mismatch vs reference (bf16)"

    print("KERNEL_OK")
</pallas_src>

<mosaic_0001>
module attributes {stable_mosaic.version = 11 : i64} {
  func.func @_stochastic_depth_kernel(%arg0: i32, %arg1: memref<2x256xf32, #tpu.memory_space<vmem>>, %arg2: memref<2x1xf32, #tpu.memory_space<vmem>>, %arg3: memref<2x256xf32, #tpu.memory_space<vmem>>) attributes {dimension_semantics = [#tpu.dimension_semantics<parallel>], iteration_bounds = array<i64: 1>, scalar_prefetch = 0 : i64, scratch_operands = 0 : i64, tpu.core_type = #tpu.core_type<tc>, window_params = [{transform_indices = @transform_0, window_bounds = array<i64: 2, 256>}, {transform_indices = @transform_1, window_bounds = array<i64: 2, 1>}, {transform_indices = @transform_2, window_bounds = array<i64: 2, 256>}]} {
    %c0 = arith.constant 0 : index
    %c0_0 = arith.constant 0 : index
    %0 = vector.load %arg1[%c0, %c0_0] : memref<2x256xf32, #tpu.memory_space<vmem>>, vector<2x256xf32>
    %c0_1 = arith.constant 0 : index
    %c0_2 = arith.constant 0 : index
    %1 = vector.load %arg2[%c0_1, %c0_2] : memref<2x1xf32, #tpu.memory_space<vmem>>, vector<2x1xf32>
    %2 = vector.broadcast %1 : vector<2x1xf32> to vector<2x256xf32>
    %3 = arith.mulf %0, %2 : vector<2x256xf32>
    %c0_3 = arith.constant 0 : index
    %c0_4 = arith.constant 0 : index
    %4 = vector.load %arg3[%c0_3, %c0_4] : memref<2x256xf32, #tpu.memory_space<vmem>>, vector<2x256xf32>
    tpu.vector_store %arg3[%c0_3, %c0_4], %3 {strides = array<i32>} : memref<2x256xf32, #tpu.memory_space<vmem>>, vector<2x256xf32>,
    return
  }
  func.func @transform_0(%arg0: i32) -> (i32, i32) {
    %c0_i32 = arith.constant 0 : i32
    %c0_i32_0 = arith.constant 0 : i32
    return %arg0, %c0_i32 : i32, i32
  }
  func.func @transform_1(%arg0: i32) -> (i32, i32) {
    %c0_i32 = arith.constant 0 : i32
    %c0_i32_0 = arith.constant 0 : i32
    return %arg0, %c0_i32 : i32, i32
  }
  func.func @transform_2(%arg0: i32) -> (i32, i32) {
    %c0_i32 = arith.constant 0 : i32
    %c0_i32_0 = arith.constant 0 : i32
    return %arg0, %c0_i32 : i32, i32
  }
}

</mosaic_0001>

<llo_original>
// kernel: tpu_custom_call.1
$region0: #{tpu_custom_call.1}
  #allocation0 [shape = 'u32[]', space=smem, size = 0x4, offset = 0x4, fixed_abs, tag = 'smem constant byte address 0x4 - core index']
  #allocation1 [shape = 'u32[144,128]{1,0:T(1,128)}', space=vmem, size = 0x12000, scoped, tag = 'internal scratch']
  %s0 = inlined_call_operand.hbm [shape: f32[2,256], index: 0, kind: input, shape index: {}]
  %s1 = inlined_call_operand.vmem [shape: f32[2,1], index: 1, kind: input, shape index: {}]
  %s2 = inlined_call_operand.hbm [shape: f32[2,256], index: 2, kind: output, shape index: {}]
  %s3 = sld [smem:[#allocation0]]
  $region22: #{tpu_custom_call.1} parent=0
    _
  %s5 = ssub.s32 1, %s3
  %s6 = scalar_select 0, %s5, %s3
  $region1: #{tpu_custom_call.1} parent=0
    #allocation2 [shape = 'u8[2048]{0}', space=vmem, size = 0x800, scoped, tag = 'input window, operand 0, single buffered']
    #allocation3 [shape = 's32[1]{0}', space=sflag, size = 0x4, scoped, tag = 'scoped memory for tpu_custom_call.1']
    #allocation4 [shape = 's32[1]{0}', space=sflag, size = 0x4, scoped, tag = 'scoped memory for tpu_custom_call.1']
    #allocation5 [shape = 'u8[2048]{0}', space=vmem, size = 0x800, scoped, tag = 'output window, operand 0, single buffered']
    %7 = vsyncpa [#allocation3], 0
    %8 = vsyncpa [#allocation4], 0
    // Predicated region
    $region2: #{tpu_custom_call.1} parent=1 // pred_check
      _
    $region3: #{tpu_custom_call.1} parent=1 // pred_check_branch
      %10 = sbr.rel (0) target = $region5
    $region4: #{tpu_custom_call.1} parent=1 // pred_region
      %s12 = ssub.s32 64, 64
      %13 = vsyncadd [#allocation3], %s12
      %s15 = sshll.u32 [#allocation2], 4
      %s16 = int_to_ptr.vmem [resolvable:$true] %s15
      %18 = dma.hbm_to_vmem [thread:$0]  %s0, 64, %s16, [#allocation3]
    $region5: #{tpu_custom_call.1} parent=1 // pred_fallthru
      _
    // Predicated region
    $region6: #{tpu_custom_call.1} parent=1 // pred_check
      _
    $region7: #{tpu_custom_call.1} parent=1 // pred_check_branch
      %20 = sbr.rel (0) target = $region9
    $region8: #{tpu_custom_call.1} parent=1 // pred_region
      _
    $region9: #{tpu_custom_call.1} parent=1 // pred_fallthru
      _
    // Predicated region
    $region10: #{tpu_custom_call.1} parent=1 // pred_check
      _
    $region11: #{tpu_custom_call.1} parent=1 // pred_check_branch
      %22 = sbr.rel (0) target = $region13
    $region12: #{tpu_custom_call.1} parent=1 // pred_region
      %23 = dma.done [#allocation3], 64
    $region13: #{tpu_custom_call.1} parent=1 // pred_fallthru
      _
    %v24 = vld [vmem:[#allocation2] sm:$0xf]
    %v25 = vld [vmem:[%s1] sm:$0x3]
    %27 = vset.pattern.permute.xlu0 0
    %28 = vperm.xlu0 %27, %v25
    %v29 = vpop.permute.xlu0 %28
    %v31 = vunpack.c.l.s4 269488144
    %v32 = vunpack.c.0.s8 %v31
    %v33 = vlaneseq
    %v34 = vshrl.u32 %v33, 7
    %v35 = vsub.s32 %v32, %v34
    %v36 = vrot.slane %v29, %v35
    %v38 = vmul.f32 %v24, %v36
    %39 = vst [vmem:[#allocation5] sm:$0xf] %v38
    // Predicated region
    $region14: #{tpu_custom_call.1} parent=1 // pred_check
      _
    $region15: #{tpu_custom_call.1} parent=1 // pred_check_branch
      %41 = sbr.rel (0) target = $region17
    $region16: #{tpu_custom_call.1} parent=1 // pred_region
      %s43 = ssub.s32 64, 64
      %44 = vsyncadd [#allocation4], %s43
      %s46 = sshll.u32 [#allocation5], 4
      %s47 = int_to_ptr.vmem [resolvable:$true] %s46
      %49 = dma.vmem_to_hbm [thread:$0]  %s47, 64, %s2, [#allocation4]
    $region17: #{tpu_custom_call.1} parent=1 // pred_fallthru
      _
    // Predicated region
    $region18: #{tpu_custom_call.1} parent=1 // pred_check
      _
    $region19: #{tpu_custom_call.1} parent=1 // pred_check_branch
      %51 = sbr.rel (0) target = $region21
    $region20: #{tpu_custom_call.1} parent=1 // pred_region
      %52 = dma.done [#allocation4], 64
    $region21: #{tpu_custom_call.1} parent=1 // pred_fallthru
      _
    %53 = vsyncpa [#allocation3], 1
    %54 = vsyncpa [#allocation4], 1

</llo_original>
